<compile_context>
chip_gen: v7x
topology: tpu7x:2x2x1
jax: 0.10.0
libtpu: 0.0.40
codegen_flags: <defaults>
</compile_context>

<pallas_src>
import functools

import jax
import jax.numpy as jnp
import numpy as np
from jax.experimental import pallas as pl
from jax.experimental.pallas import tpu as pltpu

LN_EPS = 1e-5  # PyTorch nn.LayerNorm default


def _round_up(n, m):
    return ((n + m - 1) // m) * m


def _vmem_capacity_bytes():
    """Per-core VMEM capacity; conservative 64 MiB fallback (valid everywhere)."""
    try:
        info = pltpu.get_tpu_info()
        cap = int(getattr(info, "vmem_capacity_bytes"))
        if cap > 0:
            return cap
    except Exception:
        pass
    return 64 << 20


def _choose_plan(rows, Dp, Hp, x_itemsize, w_itemsize, tm_req, th_req, cap):
    """Pick (row tile TM, hidden block TH, vmem_limit) that fit the VMEM budget."""
    budget = max(int(cap * 0.80), 32 << 20)  # headroom for Mosaic internal scratch

    tm = tm_req if tm_req is not None else (512 if cap >= (96 << 20) else 256)
    tm = max(16, min(_round_up(tm, 16), _round_up(rows, 16)))

    if th_req is not None:
        assert th_req % 128 == 0 and Hp % th_req == 0, "th must be a 128-multiple divisor of padded H"
        th_cands = [th_req]
    else:
        th_cands = [Hp] + [c for c in (8192, 4096, 2048, 1024, 512, 256, 128)
                           if c < Hp and Hp % c == 0]

    def fits(tm_, th_):
        n_h = Hp // th_
        wbuf = 1 if n_h == 1 else 2                       # resident vs streamed weights
        io = 4 * tm_ * Dp * x_itemsize                    # x + out, double-buffered
        wts = wbuf * (2 * Dp * th_ * w_itemsize + th_ * 4)  # W1/W2 slabs + b1 slab
        small = 4 * Dp * 4                                # b2, gamma, beta, mask
        acc = (0 if n_h == 1 else tm_ * Dp * 4)           # f32 accumulator scratch
        tmp = 4 * tm_ * max(th_, Dp) * 4                  # f32 in-kernel temporaries
        return io + wts + small + acc + tmp <= budget

    while True:
        for th in th_cands:
            if fits(tm, th):
                return tm, th, budget
        if tm <= 16:
            return tm, th_cands[-1], budget               # give up shrinking
        tm = max(16, _round_up(tm // 2, 16))


def mlp_kernel(x_ref, w1_ref, b1_ref, w2_ref, b2_ref, g_ref, beta_ref, mask_ref,
               o_ref, acc_ref=None, *, inv_d, need_mask, single_h):
    """Fused linear1 -> ReLU -> linear2 (H-blocked) -> residual -> LayerNorm."""
    x_nat = x_ref[...]                                        # native dtype (TM, Dp)
    x_mm = x_nat if x_nat.dtype == w1_ref.dtype else x_nat.astype(w1_ref.dtype)

    # linear1 slab + ReLU (MXU, f32 accumulate).
    hblk = jnp.dot(x_mm, w1_ref[...], preferred_element_type=jnp.float32)
    hblk = jnp.maximum(hblk + b1_ref[...].astype(jnp.float32), 0.0)   # (TM, TH)
    h_mm = hblk if hblk.dtype == w2_ref.dtype else hblk.astype(w2_ref.dtype)

    # linear2 partial for this H slab.
    part = jnp.dot(h_mm, w2_ref[...], preferred_element_type=jnp.float32)  # (TM, Dp)

    def finalize(y_partial):
        y = y_partial + b2_ref[...].astype(jnp.float32)
        # dropout (eval mode) == identity, then residual add (f32 x only here).
        r = y + x_nat.astype(jnp.float32)
        # LayerNorm over the valid feature lanes (padded lanes of r are zero).
        mean = jnp.sum(r, axis=-1, keepdims=True) * inv_d
        cent = r - mean
        if need_mask:                      # static branch: only when D was padded
            cent = cent * mask_ref[...]    # single vmul lane-mask, no iota/select
        var = jnp.sum(cent * cent, axis=-1, keepdims=True) * inv_d
        inv = jax.lax.rsqrt(var + LN_EPS)
        out = cent * inv * g_ref[...].astype(jnp.float32) + beta_ref[...].astype(jnp.float32)
        o_ref[...] = out.astype(o_ref.dtype)

    if single_h:
        finalize(part)
    else:
        h_idx = pl.program_id(1)

        @pl.when(h_idx == 0)
        def _():
            acc_ref[...] = jnp.zeros_like(acc_ref)

        acc_ref[...] += part

        @pl.when(h_idx == pl.num_programs(1) - 1)
        def _():
            finalize(acc_ref[...])


@functools.partial(jax.jit, static_argnames=("tm", "th", "d_valid", "vmem_limit"))
def _mlp_call(x2, w1, b1, w2, b2, gamma, beta, mask, *, tm, th, d_valid, vmem_limit):
    rows_p, Dp = x2.shape
    Hp = w1.shape[1]
    n_h = Hp // th
    single_h = n_h == 1
    grid = (rows_p // tm, n_h)

    const = pl.Buffered(1)                 # constant-index inputs: single-buffered
    w_mode = const if single_h else None   # streamed weights: default double-buffer

    def wspec(shape, imap, mode):
        if mode is None:
            return pl.BlockSpec(shape, imap)
        return pl.BlockSpec(shape, imap, pipeline_mode=mode)

    kernel = functools.partial(mlp_kernel, inv_d=1.0 / d_valid,
                               need_mask=(d_valid != Dp), single_h=single_h)

    return pl.pallas_call(
        kernel,
        out_shape=jax.ShapeDtypeStruct((rows_p, Dp), x2.dtype),
        grid_spec=pltpu.PrefetchScalarGridSpec(
            num_scalar_prefetch=0,
            grid=grid,
            in_specs=[
                pl.BlockSpec((tm, Dp), lambda i, h: (i, 0)),                 # x row tile
                wspec((Dp, th), lambda i, h: (0, h), w_mode),                # W1 H-slab
                wspec((1, th), lambda i, h: (0, h), w_mode),                 # b1 H-slab
                wspec((th, Dp), lambda i, h: (h, 0), w_mode),                # W2 H-slab
                pl.BlockSpec((1, Dp), lambda i, h: (0, 0), pipeline_mode=const),  # b2
                pl.BlockSpec((1, Dp), lambda i, h: (0, 0), pipeline_mode=const),  # gamma
                pl.BlockSpec((1, Dp), lambda i, h: (0, 0), pipeline_mode=const),  # beta
                pl.BlockSpec((1, Dp), lambda i, h: (0, 0), pipeline_mode=const),  # LN lane mask
            ],
            out_specs=pl.BlockSpec((tm, Dp), lambda i, h: (i, 0)),
            scratch_shapes=([] if single_h else [pltpu.VMEM((tm, Dp), jnp.float32)]),
        ),
        compiler_params=pltpu.CompilerParams(
            # Row tiles are independent (shards across v7x's 2 TCs); H axis is a
            # reduction into the resident output/accumulator.
            dimension_semantics=("parallel", "arbitrary"),
            vmem_limit_bytes=vmem_limit,
        ),
    )(x2, w1, b1, w2, b2, gamma, beta, mask)


def prepare_params(w1, b1, w2, b2, gamma, beta, *, weights_dtype=jnp.bfloat16):
    """Pad to lane-dense (multiple-of-128) widths and cast once, outside the
    per-call path.  weights_dtype=jnp.bfloat16 (default) is the fast MXU path;
    pass jnp.float32 for a tight-tolerance debug path."""
    D, H = w1.shape
    Dp, Hp = _round_up(D, 128), _round_up(H, 128)
    wd = np.dtype(weights_dtype)
    b1 = jnp.reshape(b1, (1, -1))
    b2 = jnp.reshape(b2, (1, -1))
    gamma = jnp.reshape(gamma, (1, -1))
    beta = jnp.reshape(beta, (1, -1))
    return dict(
        w1=jnp.pad(w1, ((0, Dp - D), (0, Hp - H))).astype(wd),
        b1=jnp.pad(b1, ((0, 0), (0, Hp - H))).astype(jnp.float32),
        w2=jnp.pad(w2, ((0, Hp - H), (0, Dp - D))).astype(wd),
        b2=jnp.pad(b2, ((0, 0), (0, Dp - D))).astype(jnp.float32),
        gamma=jnp.pad(gamma, ((0, 0), (0, Dp - D))).astype(jnp.float32),
        beta=jnp.pad(beta, ((0, 0), (0, Dp - D))).astype(jnp.float32),
        mask=(jnp.arange(Dp) < D).astype(jnp.float32)[None, :],
    )


def mlp_forward(x, prepared, *, tm=None, th=None):
    """x: (B, S, D); prepared: output of prepare_params. Returns (B, S, D)."""
    B, S, D = x.shape
    Dp, Hp = prepared["w1"].shape
    assert Dp == _round_up(D, 128), "prepared params do not match x feature dim"
    rows = B * S

    cap = _vmem_capacity_bytes()
    tm_eff, th_eff, vmem_limit = _choose_plan(
        rows, Dp, Hp, x.dtype.itemsize, prepared["w1"].dtype.itemsize, tm, th, cap)

    rows_p = _round_up(rows, tm_eff)
    x2 = jnp.pad(x.reshape(rows, D), ((0, rows_p - rows), (0, Dp - D)))
    out2 = _mlp_call(x2, prepared["w1"], prepared["b1"], prepared["w2"],
                     prepared["b2"], prepared["gamma"], prepared["beta"],
                     prepared["mask"], tm=tm_eff, th=th_eff, d_valid=D,
                     vmem_limit=vmem_limit)
    return out2[:rows, :D].reshape(B, S, D)


def init_params(key, input_dim, hidden_dim):
    """Deterministic synthetic params matching nn.Linear / nn.LayerNorm shapes.

    PyTorch linear stores weight as (out, in); we keep (in, out) so the kernel
    does x @ W directly (semantically identical: y = x W^T_torch = x W_ours).
    """
    k1, k2, k3, k4 = jax.random.split(key, 4)
    s1 = 1.0 / jnp.sqrt(input_dim)
    s2 = 1.0 / jnp.sqrt(hidden_dim)
    w1 = jax.random.uniform(k1, (input_dim, hidden_dim), jnp.float32, -s1, s1)
    b1 = jax.random.uniform(k2, (1, hidden_dim), jnp.float32, -s1, s1)
    w2 = jax.random.uniform(k3, (hidden_dim, input_dim), jnp.float32, -s2, s2)
    b2 = jax.random.uniform(k4, (1, input_dim), jnp.float32, -s2, s2)
    gamma = jnp.ones((1, input_dim), jnp.float32)
    beta = jnp.zeros((1, input_dim), jnp.float32)
    return w1, b1, w2, b2, gamma, beta


def mlp_reference(x, w1, b1, w2, b2, gamma, beta):
    """Pure-JAX reference of the PyTorch forward (dropout = eval identity)."""
    h = jnp.maximum(x @ w1 + b1[0], 0.0)
    y = h @ w2 + b2[0]
    r = y + x
    mean = jnp.mean(r, axis=-1, keepdims=True)
    var = jnp.mean((r - mean) ** 2, axis=-1, keepdims=True)
    return (r - mean) * jax.lax.rsqrt(var + LN_EPS) * gamma[0] + beta[0]


if __name__ == "__main__":
    # Small shapes consistent with the module: batch=2, seq=8, input_dim=32,
    # hidden_dim=64.
    B, S, D, H = 2, 8, 32, 64
    key = jax.random.PRNGKey(0)
    kx, kp = jax.random.split(key)
    x = jax.random.normal(kx, (B, S, D), jnp.float32)
    params = init_params(kp, D, H)
    ref = mlp_reference(x.reshape(B * S, D), *params).reshape(B, S, D)

    # Default fast-MXU path: bf16 weights, f32 accumulate + f32 LayerNorm.
    prep_bf16 = prepare_params(*params)
    out = jax.block_until_ready(mlp_forward(x, prep_bf16))
    assert out.shape == (B, S, D)
    assert jnp.allclose(out, ref, atol=5e-2, rtol=5e-2), "bf16 mismatch vs reference"

    # Opt-in f32 debug path: tight match with the reference.
    prep_f32 = prepare_params(*params, weights_dtype=jnp.float32)
    out_f32 = jax.block_until_ready(mlp_forward(x, prep_f32))
    assert jnp.allclose(out_f32, ref, atol=1e-5, rtol=1e-5), "f32 mismatch vs reference"

    # Larger, non-tile-divisible row count with a forced H block (th=128 ->
    # 2 H slabs): exercises row padding, weight streaming, and the f32
    # accumulator + pl.when finalize path on a fully lane-dense D=128.
    B2, S2, D2, H2 = 2, 200, 128, 256
    kx2, kp2 = jax.random.split(jax.random.PRNGKey(1))
    x_big = jax.random.normal(kx2, (B2, S2, D2), jnp.float32)
    params_big = init_params(kp2, D2, H2)
    prep_big = prepare_params(*params_big, weights_dtype=jnp.float32)
    out_big = jax.block_until_ready(mlp_forward(x_big, prep_big, th=128))
    ref_big = mlp_reference(x_big.reshape(B2 * S2, D2),
                            *params_big).reshape(B2, S2, D2)
    assert jnp.allclose(out_big, ref_big, atol=1e-3, rtol=1e-3), "H-blocked mismatch"

    # TODO(synk): training-mode dropout (random mask + 1/(1-p) scale) not
    # implemented; forward matches the PyTorch module in eval() mode.
    # TODO(synk): optional fp8 weight path for v7x (needs per-channel scaling).
    print("KERNEL_OK")
</pallas_src>

<mosaic_0001>
module attributes {stable_mosaic.version = 11 : i64} {
  func.func @mlp_kernel(%arg0: i32, %arg1: i32, %arg2: memref<16x128xf32, #tpu.memory_space<vmem>>, %arg3: memref<128x128xbf16, #tpu.memory_space<vmem>>, %arg4: memref<1x128xf32, #tpu.memory_space<vmem>>, %arg5: memref<128x128xbf16, #tpu.memory_space<vmem>>, %arg6: memref<1x128xf32, #tpu.memory_space<vmem>>, %arg7: memref<1x128xf32, #tpu.memory_space<vmem>>, %arg8: memref<1x128xf32, #tpu.memory_space<vmem>>, %arg9: memref<1x128xf32, #tpu.memory_space<vmem>>, %arg10: memref<16x128xf32, #tpu.memory_space<vmem>>) attributes {dimension_semantics = [#tpu.dimension_semantics<parallel>, #tpu.dimension_semantics<arbitrary>], iteration_bounds = array<i64: 1, 1>, scalar_prefetch = 0 : i64, scratch_operands = 0 : i64, tpu.core_type = #tpu.core_type<tc>, window_params = [{transform_indices = @transform_0, window_bounds = array<i64: 16, 128>}, {pipeline_mode = #tpu.pipeline_mode<synchronous>, transform_indices = @transform_1, window_bounds = array<i64: 128, 128>}, {pipeline_mode = #tpu.pipeline_mode<synchronous>, transform_indices = @transform_2, window_bounds = array<i64: 1, 128>}, {pipeline_mode = #tpu.pipeline_mode<synchronous>, transform_indices = @transform_3, window_bounds = array<i64: 128, 128>}, {pipeline_mode = #tpu.pipeline_mode<synchronous>, transform_indices = @transform_4, window_bounds = array<i64: 1, 128>}, {pipeline_mode = #tpu.pipeline_mode<synchronous>, transform_indices = @transform_5, window_bounds = array<i64: 1, 128>}, {pipeline_mode = #tpu.pipeline_mode<synchronous>, transform_indices = @transform_6, window_bounds = array<i64: 1, 128>}, {pipeline_mode = #tpu.pipeline_mode<synchronous>, transform_indices = @transform_7, window_bounds = array<i64: 1, 128>}, {transform_indices = @transform_8, window_bounds = array<i64: 16, 128>}]} {
    %c0 = arith.constant 0 : index
    %c0_0 = arith.constant 0 : index
    %0 = vector.load %arg2[%c0, %c0_0] : memref<16x128xf32, #tpu.memory_space<vmem>>, vector<16x128xf32>
    %1 = arith.truncf %0 : vector<16x128xf32> to vector<16x128xbf16>
    %c0_1 = arith.constant 0 : index
    %c0_2 = arith.constant 0 : index
    %2 = vector.load %arg3[%c0_1, %c0_2] : memref<128x128xbf16, #tpu.memory_space<vmem>>, vector<128x128xbf16>
    %cst = arith.constant dense<0.000000e+00> : vector<16x128xf32>
    %3 = tpu.matmul %1, %2, %cst {dimension_numbers = #tpu.dot_dimension_numbers<[1], [0], [0], [1], [0, 0, 1, 1], [], []>} : vector<16x128xbf16>, vector<128x128xbf16>, vector<16x128xf32> -> vector<16x128xf32>
    %c0_3 = arith.constant 0 : index
    %c0_4 = arith.constant 0 : index
    %4 = vector.load %arg4[%c0_3, %c0_4] : memref<1x128xf32, #tpu.memory_space<vmem>>, vector<1x128xf32>
    %5 = vector.broadcast %4 : vector<1x128xf32> to vector<16x128xf32>
    %6 = arith.addf %3, %5 : vector<16x128xf32>
    %cst_5 = arith.constant 0.000000e+00 : f32
    %7 = vector.broadcast %cst_5 : f32 to vector<16x128xf32>
    %8 = arith.maximumf %6, %7 : vector<16x128xf32>
    %9 = arith.truncf %8 : vector<16x128xf32> to vector<16x128xbf16>
    %c0_6 = arith.constant 0 : index
    %c0_7 = arith.constant 0 : index
    %10 = vector.load %arg5[%c0_6, %c0_7] : memref<128x128xbf16, #tpu.memory_space<vmem>>, vector<128x128xbf16>
    %cst_8 = arith.constant dense<0.000000e+00> : vector<16x128xf32>
    %11 = tpu.matmul %9, %10, %cst_8 {dimension_numbers = #tpu.dot_dimension_numbers<[1], [0], [0], [1], [0, 0, 1, 1], [], []>} : vector<16x128xbf16>, vector<128x128xbf16>, vector<16x128xf32> -> vector<16x128xf32>
    %c0_9 = arith.constant 0 : index
    %c0_10 = arith.constant 0 : index
    %12 = vector.load %arg6[%c0_9, %c0_10] : memref<1x128xf32, #tpu.memory_space<vmem>>, vector<1x128xf32>
    %13 = vector.broadcast %12 : vector<1x128xf32> to vector<16x128xf32>
    %14 = arith.addf %11, %13 : vector<16x128xf32>
    %15 = arith.addf %14, %0 : vector<16x128xf32>
    %cst_11 = arith.constant dense<0.000000e+00> : vector<16xf32>
    %16 = vector.multi_reduction <add>, %15, %cst_11 [1] : vector<16x128xf32> to vector<16xf32>
    %17 = vector.shape_cast %16 : vector<16xf32> to vector<16x1xf32>
    %cst_12 = arith.constant 3.125000e-02 : f32
    %18 = vector.broadcast %cst_12 : f32 to vector<16x1xf32>
    %19 = arith.mulf %17, %18 : vector<16x1xf32>
    %20 = vector.broadcast %19 : vector<16x1xf32> to vector<16x128xf32>
    %21 = arith.subf %15, %20 : vector<16x128xf32>
    %c0_13 = arith.constant 0 : index
    %c0_14 = arith.constant 0 : index
    %22 = vector.load %arg9[%c0_13, %c0_14] : memref<1x128xf32, #tpu.memory_space<vmem>>, vector<1x128xf32>
    %23 = vector.broadcast %22 : vector<1x128xf32> to vector<16x128xf32>
    %24 = arith.mulf %21, %23 : vector<16x128xf32>
    %25 = arith.mulf %24, %24 : vector<16x128xf32>
    %cst_15 = arith.constant dense<0.000000e+00> : vector<16xf32>
    %26 = vector.multi_reduction <add>, %25, %cst_15 [1] : vector<16x128xf32> to vector<16xf32>
    %27 = vector.shape_cast %26 : vector<16xf32> to vector<16x1xf32>
    %cst_16 = arith.constant 3.125000e-02 : f32
    %28 = vector.broadcast %cst_16 : f32 to vector<16x1xf32>
    %29 = arith.mulf %27, %28 : vector<16x1xf32>
    %cst_17 = arith.constant 9.99999974E-6 : f32
    %30 = vector.broadcast %cst_17 : f32 to vector<16x1xf32>
    %31 = arith.addf %29, %30 : vector<16x1xf32>
    %32 = math.rsqrt %31 : vector<16x1xf32>
    %33 = vector.broadcast %32 : vector<16x1xf32> to vector<16x128xf32>
    %34 = arith.mulf %24, %33 : vector<16x128xf32>
    %c0_18 = arith.constant 0 : index
    %c0_19 = arith.constant 0 : index
    %35 = vector.load %arg7[%c0_18, %c0_19] : memref<1x128xf32, #tpu.memory_space<vmem>>, vector<1x128xf32>
    %36 = vector.broadcast %35 : vector<1x128xf32> to vector<16x128xf32>
    %37 = arith.mulf %34, %36 : vector<16x128xf32>
    %c0_20 = arith.constant 0 : index
    %c0_21 = arith.constant 0 : index
    %38 = vector.load %arg8[%c0_20, %c0_21] : memref<1x128xf32, #tpu.memory_space<vmem>>, vector<1x128xf32>
    %39 = vector.broadcast %38 : vector<1x128xf32> to vector<16x128xf32>
    %40 = arith.addf %37, %39 : vector<16x128xf32>
    %c0_22 = arith.constant 0 : index
    %c0_23 = arith.constant 0 : index
    %41 = vector.load %arg10[%c0_22, %c0_23] : memref<16x128xf32, #tpu.memory_space<vmem>>, vector<16x128xf32>
    tpu.vector_store %arg10[%c0_22, %c0_23], %40 {strides = array<i32>} : memref<16x128xf32, #tpu.memory_space<vmem>>, vector<16x128xf32>,
    return
  }
  func.func @transform_0(%arg0: i32, %arg1: i32) -> (i32, i32) {
    %c0_i32 = arith.constant 0 : i32
    %c0_i32_0 = arith.constant 0 : i32
    return %arg0, %c0_i32 : i32, i32
  }
  func.func @transform_1(%arg0: i32, %arg1: i32) -> (i32, i32) {
    %c0_i32 = arith.constant 0 : i32
    %c0_i32_0 = arith.constant 0 : i32
    return %c0_i32, %arg1 : i32, i32
  }
  func.func @transform_2(%arg0: i32, %arg1: i32) -> (i32, i32) {
    %c0_i32 = arith.constant 0 : i32
    %c0_i32_0 = arith.constant 0 : i32
    return %c0_i32, %arg1 : i32, i32
  }
  func.func @transform_3(%arg0: i32, %arg1: i32) -> (i32, i32) {
    %c0_i32 = arith.constant 0 : i32
    %c0_i32_0 = arith.constant 0 : i32
    return %arg1, %c0_i32 : i32, i32
  }
  func.func @transform_4(%arg0: i32, %arg1: i32) -> (i32, i32) {
    %c0_i32 = arith.constant 0 : i32
    %c0_i32_0 = arith.constant 0 : i32
    %c0_i32_1 = arith.constant 0 : i32
    return %c0_i32, %c0_i32_0 : i32, i32
  }
  func.func @transform_5(%arg0: i32, %arg1: i32) -> (i32, i32) {
    %c0_i32 = arith.constant 0 : i32
    %c0_i32_0 = arith.constant 0 : i32
    %c0_i32_1 = arith.constant 0 : i32
    return %c0_i32, %c0_i32_0 : i32, i32
  }
  func.func @transform_6(%arg0: i32, %arg1: i32) -> (i32, i32) {
    %c0_i32 = arith.constant 0 : i32
    %c0_i32_0 = arith.constant 0 : i32
    %c0_i32_1 = arith.constant 0 : i32
    return %c0_i32, %c0_i32_0 : i32, i32
  }
  func.func @transform_7(%arg0: i32, %arg1: i32) -> (i32, i32) {
    %c0_i32 = arith.constant 0 : i32
    %c0_i32_0 = arith.constant 0 : i32
    %c0_i32_1 = arith.constant 0 : i32
    return %c0_i32, %c0_i32_0 : i32, i32
  }
  func.func @transform_8(%arg0: i32, %arg1: i32) -> (i32, i32) {
    %c0_i32 = arith.constant 0 : i32
    %c0_i32_0 = arith.constant 0 : i32
    return %arg0, %c0_i32 : i32, i32
  }
}

</mosaic_0001>

<llo_original>
// kernel: _mlp_call.1
$region0: #{_mlp_call.1}
  #allocation0 [shape = 'u32[]', space=smem, size = 0x4, offset = 0x4, fixed_abs, tag = 'smem constant byte address 0x4 - core index']
  #allocation1 [shape = 'u32[144,128]{1,0:T(1,128)}', space=vmem, size = 0x12000, scoped, tag = 'internal scratch']
  %s0 = inlined_call_operand.hbm [shape: f32[16,128], index: 0, kind: input, shape index: {}]
  %s1 = inlined_call_operand.hbm [shape: bf16[128,128], index: 1, kind: input, shape index: {}]
  %s2 = inlined_call_operand.vmem [shape: f32[1,128], index: 2, kind: input, shape index: {}]
  %s3 = inlined_call_operand.hbm [shape: bf16[128,128], index: 3, kind: input, shape index: {}]
  %s4 = inlined_call_operand.vmem [shape: f32[1,128], index: 4, kind: input, shape index: {}]
  %s5 = inlined_call_operand.vmem [shape: f32[1,128], index: 5, kind: input, shape index: {}]
  %s6 = inlined_call_operand.vmem [shape: f32[1,128], index: 6, kind: input, shape index: {}]
  %s7 = inlined_call_operand.vmem [shape: f32[1,128], index: 7, kind: input, shape index: {}]
  %s8 = inlined_call_operand.hbm [shape: f32[16,128], index: 8, kind: output, shape index: {}]
  %s9 = sld [smem:[#allocation0]]
  $region54: #{_mlp_call.1} parent=0
    _
  %s11 = ssub.s32 1, %s9
  %s12 = scalar_select 0, %s11, %s9
  $region1: #{_mlp_call.1} parent=0
    #allocation2 [shape = 'u8[8192]{0}', space=vmem, size = 0x2000, scoped, tag = 'input window, operand 0, single buffered']
    #allocation3 [shape = 's32[1]{0}', space=sflag, size = 0x4, scoped, tag = 'scoped memory for _mlp_call.1']
    #allocation4 [shape = 's32[1]{0}', space=sflag, size = 0x4, scoped, tag = 'scoped memory for _mlp_call.1']
    #allocation5 [shape = 'u8[32768]{0}', space=vmem, size = 0x8000, scoped, tag = 'input window, operand 1, single buffered']
    #allocation6 [shape = 's32[1]{0}', space=sflag, size = 0x4, scoped, tag = 'scoped memory for _mlp_call.1']
    #allocation7 [shape = 'u8[32768]{0}', space=vmem, size = 0x8000, scoped, tag = 'input window, operand 3, single buffered']
    #allocation8 [shape = 'u8[8192]{0}', space=vmem, size = 0x2000, scoped, tag = 'output window, operand 0, single buffered']
    %13 = vsyncpa [#allocation3], 0
    %14 = vsyncpa [#allocation6], 0
    %15 = vsyncpa [#allocation4], 0
    // Predicated region
    $region2: #{_mlp_call.1} parent=1 // pred_check
      _
    $region3: #{_mlp_call.1} parent=1 // pred_check_branch
      %17 = sbr.rel (0) target = $region5
    $region4: #{_mlp_call.1} parent=1 // pred_region
      %s19 = ssub.s32 256, 256
      %20 = vsyncadd [#allocation3], %s19
      %s21 = sshll.u32 [#allocation2], 4
      %s22 = int_to_ptr.vmem [resolvable:$true] %s21
      %27 = dma.hbm_to_vmem [thread:$0]  %s0, 256, %s22, [#allocation3], 128, 128, 8
    $region5: #{_mlp_call.1} parent=1 // pred_fallthru
      _
    // Predicated region
    $region6: #{_mlp_call.1} parent=1 // pred_check
      _
    $region7: #{_mlp_call.1} parent=1 // pred_check_branch
      %29 = sbr.rel (0) target = $region9
    $region8: #{_mlp_call.1} parent=1 // pred_region
      %s31 = ssub.s32 1024, 1024
      %32 = vsyncadd [#allocation6], %s31
      %s33 = sshll.u32 [#allocation5], 4
      %s34 = int_to_ptr.vmem [resolvable:$true] %s33
      %39 = dma.hbm_to_vmem [thread:$0]  %s1, 1024, %s34, [#allocation6], 64, 64, 4
    $region9: #{_mlp_call.1} parent=1 // pred_fallthru
      _
    // Predicated region
    $region10: #{_mlp_call.1} parent=1 // pred_check
      _
    $region11: #{_mlp_call.1} parent=1 // pred_check_branch
      %41 = sbr.rel (0) target = $region13
    $region12: #{_mlp_call.1} parent=1 // pred_region
      _
    $region13: #{_mlp_call.1} parent=1 // pred_fallthru
      _
    // Predicated region
    $region14: #{_mlp_call.1} parent=1 // pred_check
      _
    $region15: #{_mlp_call.1} parent=1 // pred_check_branch
      %43 = sbr.rel (0) target = $region17
    $region16: #{_mlp_call.1} parent=1 // pred_region
      %s45 = ssub.s32 1024, 1024
      %46 = vsyncadd [#allocation6], %s45
      %s47 = sshll.u32 [#allocation7], 4
      %s48 = int_to_ptr.vmem [resolvable:$true] %s47
      %53 = dma.hbm_to_vmem [thread:$0]  %s3, 1024, %s48, [#allocation6], 64, 64, 4
    $region17: #{_mlp_call.1} parent=1 // pred_fallthru
      _
    // Predicated region
    $region18: #{_mlp_call.1} parent=1 // pred_check
      _
    $region19: #{_mlp_call.1} parent=1 // pred_check_branch
      %55 = sbr.rel (0) target = $region21
    $region20: #{_mlp_call.1} parent=1 // pred_region
      _
    $region21: #{_mlp_call.1} parent=1 // pred_fallthru
      _
    // Predicated region
    $region22: #{_mlp_call.1} parent=1 // pred_check
      _
    $region23: #{_mlp_call.1} parent=1 // pred_check_branch
      %57 = sbr.rel (0) target = $region25
    $region24: #{_mlp_call.1} parent=1 // pred_region
      _
    $region25: #{_mlp_call.1} parent=1 // pred_fallthru
      _
    // Predicated region
    $region26: #{_mlp_call.1} parent=1 // pred_check
      _
    $region27: #{_mlp_call.1} parent=1 // pred_check_branch
      %59 = sbr.rel (0) target = $region29
    $region28: #{_mlp_call.1} parent=1 // pred_region
      _
    $region29: #{_mlp_call.1} parent=1 // pred_fallthru
      _
    // Predicated region
    $region30: #{_mlp_call.1} parent=1 // pred_check
      _
    $region31: #{_mlp_call.1} parent=1 // pred_check_branch
      %61 = sbr.rel (0) target = $region33
    $region32: #{_mlp_call.1} parent=1 // pred_region
      _
    $region33: #{_mlp_call.1} parent=1 // pred_fallthru
      _
    // Predicated region
    $region34: #{_mlp_call.1} parent=1 // pred_check
      _
    $region35: #{_mlp_call.1} parent=1 // pred_check_branch
      %63 = sbr.rel (0) target = $region37
    $region36: #{_mlp_call.1} parent=1 // pred_region
      %64 = dma.done [#allocation3], 256
    $region37: #{_mlp_call.1} parent=1 // pred_fallthru
      _
    // Predicated region
    $region38: #{_mlp_call.1} parent=1 // pred_check
      _
    $region39: #{_mlp_call.1} parent=1 // pred_check_branch
      %66 = sbr.rel (0) target = $region41
    $region40: #{_mlp_call.1} parent=1 // pred_region
      %67 = dma.done [#allocation6], 1024
    $region41: #{_mlp_call.1} parent=1 // pred_fallthru
      _
    // Predicated region
    $region42: #{_mlp_call.1} parent=1 // pred_check
      _
    $region43: #{_mlp_call.1} parent=1 // pred_check_branch
      %69 = sbr.rel (0) target = $region45
    $region44: #{_mlp_call.1} parent=1 // pred_region
      %70 = dma.done [#allocation6], 1024
    $region45: #{_mlp_call.1} parent=1 // pred_fallthru
      _
    %v72 = vld [vmem:[#allocation2] sm:$0xff]
    %v73 = vld [vmem:[#allocation2 + $0x8] sm:$0xff]
    %v74 = vpack.c.bf16 %v73, %v72
    %v75 = vld [vmem:[#allocation5] sm:$0xf]
    %v76 = vld [vmem:[#allocation5 + $0x4] sm:$0xf]
    %v77 = vld [vmem:[#allocation5 + $0x8] sm:$0xf]
    %v78 = vld [vmem:[#allocation5 + $0xc] sm:$0xf]
    %v79 = vld [vmem:[#allocation5 + $0x10] sm:$0xf]
    %v80 = vld [vmem:[#allocation5 + $0x14] sm:$0xf]
    %v81 = vld [vmem:[#allocation5 + $0x18] sm:$0xf]
    %v82 = vld [vmem:[#allocation5 + $0x1c] sm:$0xf]
    %v83 = vld [vmem:[#allocation5 + $0x20] sm:$0xf]
    %v84 = vld [vmem:[#allocation5 + $0x24] sm:$0xf]
    %v85 = vld [vmem:[#allocation5 + $0x28] sm:$0xf]
    %v86 = vld [vmem:[#allocation5 + $0x2c] sm:$0xf]
    %v87 = vld [vmem:[#allocation5 + $0x30] sm:$0xf]
    %v88 = vld [vmem:[#allocation5 + $0x34] sm:$0xf]
    %v89 = vld [vmem:[#allocation5 + $0x38] sm:$0xf]
    %v90 = vld [vmem:[#allocation5 + $0x3c] sm:$0xf]
    %v91 = vld [vmem:[%s2] sm:$0x1]
    %v93 = vlaneseq
    %v94 = vshrl.u32 %v93, 7
    %v95 = vsub.s32 0, %v94
    %v96 = vrot.slane %v91, %v95
    %v114 = vunpack.c.l.b16 %v75
    %v115 = vunpack.c.l.b16 %v76
    %v116 = vunpack.c.l.b16 %v77
    %v117 = vunpack.c.l.b16 %v78
    %v118 = vunpack.c.l.b16 %v79
    %v119 = vunpack.c.l.b16 %v80
    %v120 = vunpack.c.l.b16 %v81
    %v121 = vunpack.c.l.b16 %v82
    %v122 = vunpack.c.l.b16 %v83
    %v123 = vunpack.c.l.b16 %v84
    %v124 = vunpack.c.l.b16 %v85
    %v125 = vunpack.c.l.b16 %v86
    %v126 = vunpack.c.l.b16 %v87
    %v127 = vunpack.c.l.b16 %v88
    %v128 = vunpack.c.l.b16 %v89
    %v129 = vunpack.c.l.b16 %v90
    %v130 = vpack.c.b16 %v115, %v114
    %v131 = vpack.c.b16 %v117, %v116
    %v132 = vpack.c.b16 %v119, %v118
    %v133 = vpack.c.b16 %v121, %v120
    %v134 = vpack.c.b16 %v123, %v122
    %v135 = vpack.c.b16 %v125, %v124
    %v136 = vpack.c.b16 %v127, %v126
    %v137 = vpack.c.b16 %v129, %v128
    %146 = vmatprep.subr.bf16.mxu0 0
    %147 = vmatpush1.bf16.msra.mxu0 %v130
    %148 = vmatprep.subr.bf16.mxu0 0
    %149 = vmatpush1.bf16.msra.mxu0 %v131
    %150 = vmatprep.subr.bf16.mxu0 0
    %151 = vmatpush1.bf16.msra.mxu0 %v132
    %152 = vmatprep.subr.bf16.mxu0 0
    %153 = vmatpush1.bf16.msra.mxu0 %v133
    %154 = vmatprep.subr.bf16.mxu0 0
    %155 = vmatpush1.bf16.msra.mxu0 %v134
    %156 = vmatprep.subr.bf16.mxu0 0
    %157 = vmatpush1.bf16.msra.mxu0 %v135
    %158 = vmatprep.subr.bf16.mxu0 0
    %159 = vmatpush1.bf16.msra.mxu0 %v136
    %160 = vmatprep.subr.bf16.mxu0 0
    %161 = vmatpush1.bf16.msra.mxu0 %v137
    %162 = vmatprep.subr.bf16.mxu0 0
    %163 = vmatpush1.bf16.msra.mxu0 0
    %164 = vmatprep.subr.bf16.mxu0 0
    %165 = vmatpush1.bf16.msra.mxu0 0
    %166 = vmatprep.subr.bf16.mxu0 0
    %167 = vmatpush1.bf16.msra.mxu0 0
    %168 = vmatprep.subr.bf16.mxu0 0
    %169 = vmatpush1.bf16.msra.mxu0 0
    %170 = vmatprep.subr.bf16.mxu0 0
    %171 = vmatpush1.bf16.msra.mxu0 0
    %172 = vmatprep.subr.bf16.mxu0 0
    %173 = vmatpush1.bf16.msra.mxu0 0
    %174 = vmatprep.subr.bf16.mxu0 0
    %175 = vmatpush1.bf16.msra.mxu0 0
    %176 = vmatprep.subr.bf16.mxu0 0
    %177 = vmatpush1.bf16.msra.mxu0 0
    %178 = vmatprep.mubr.bf16.mxu0 0
    %179 = vmatmul.mubr.bf16.gmra.mrb[0].mxu0 %v74
    %v180 = vpop.f32.mrb[0].mxu0
    %v181 = vadd.f32 %v96, %v180
    %v182 = vpop.f32.mrb[0].mxu0
    %v183 = vpop.f32.mrb[0].mxu0
    %v184 = vadd.f32 %v96, %v183
    %v185 = vpop.f32.mrb[0].mxu0
    %186 = vdwg.mxu0
    %v187 = vmax.f32 %v181, 0.0
    %v188 = vmax.f32 %v184, 0.0
    %v189 = vpack.c.bf16 %v188, %v187
    %v190 = vld [vmem:[#allocation7] sm:$0xf]
    %v191 = vld [vmem:[#allocation7 + $0x4] sm:$0xf]
    %v192 = vld [vmem:[#allocation7 + $0x8] sm:$0xf]
    %v193 = vld [vmem:[#allocation7 + $0xc] sm:$0xf]
    %v194 = vld [vmem:[#allocation7 + $0x10] sm:$0xf]
    %v195 = vld [vmem:[#allocation7 + $0x14] sm:$0xf]
    %v196 = vld [vmem:[#allocation7 + $0x18] sm:$0xf]
    %v197 = vld [vmem:[#allocation7 + $0x1c] sm:$0xf]
    %v198 = vld [vmem:[#allocation7 + $0x20] sm:$0xf]
    %v199 = vld [vmem:[#allocation7 + $0x24] sm:$0xf]
    %v200 = vld [vmem:[#allocation7 + $0x28] sm:$0xf]
    %v201 = vld [vmem:[#allocation7 + $0x2c] sm:$0xf]
    %v202 = vld [vmem:[#allocation7 + $0x30] sm:$0xf]
    %v203 = vld [vmem:[#allocation7 + $0x34] sm:$0xf]
    %v204 = vld [vmem:[#allocation7 + $0x38] sm:$0xf]
    %v205 = vld [vmem:[#allocation7 + $0x3c] sm:$0xf]
    %v206 = vld [vmem:[%s4] sm:$0x1]
    %v208 = vlaneseq
    %v209 = vshrl.u32 %v208, 7
    %v210 = vsub.s32 0, %v209
    %v211 = vrot.slane %v206, %v210
    %v229 = vunpack.c.l.b16 %v190
    %v230 = vunpack.c.l.b16 %v191
    %v231 = vunpack.c.l.b16 %v192
    %v232 = vunpack.c.l.b16 %v193
    %v233 = vunpack.c.l.b16 %v194
    %v234 = vunpack.c.l.b16 %v195
    %v235 = vunpack.c.l.b16 %v196
    %v236 = vunpack.c.l.b16 %v197
    %v237 = vunpack.c.l.b16 %v198
    %v238 = vunpack.c.l.b16 %v199
    %v239 = vunpack.c.l.b16 %v200
    %v240 = vunpack.c.l.b16 %v201
    %v241 = vunpack.c.l.b16 %v202
    %v242 = vunpack.c.l.b16 %v203
    %v243 = vunpack.c.l.b16 %v204
    %v244 = vunpack.c.l.b16 %v205
    %v245 = vpack.c.b16 %v230, %v229
    %v246 = vpack.c.b16 %v232, %v231
    %v247 = vpack.c.b16 %v234, %v233
    %v248 = vpack.c.b16 %v236, %v235
    %v249 = vpack.c.b16 %v238, %v237
    %v250 = vpack.c.b16 %v240, %v239
    %v251 = vpack.c.b16 %v242, %v241
    %v252 = vpack.c.b16 %v244, %v243
    %261 = vmatprep.subr.bf16.mxu0 0
    %262 = vmatpush1.bf16.msra.mxu0 %v245
    %263 = vmatprep.subr.bf16.mxu0 0
    %264 = vmatpush1.bf16.msra.mxu0 %v246
    %265 = vmatprep.subr.bf16.mxu0 0
    %266 = vmatpush1.bf16.msra.mxu0 %v247
    %267 = vmatprep.subr.bf16.mxu0 0
    %268 = vmatpush1.bf16.msra.mxu0 %v248
    %269 = vmatprep.subr.bf16.mxu0 0
    %270 = vmatpush1.bf16.msra.mxu0 %v249
    %271 = vmatprep.subr.bf16.mxu0 0
    %272 = vmatpush1.bf16.msra.mxu0 %v250
    %273 = vmatprep.subr.bf16.mxu0 0
    %274 = vmatpush1.bf16.msra.mxu0 %v251
    %275 = vmatprep.subr.bf16.mxu0 0
    %276 = vmatpush1.bf16.msra.mxu0 %v252
    %277 = vmatprep.subr.bf16.mxu0 0
    %278 = vmatpush1.bf16.msra.mxu0 0
    %279 = vmatprep.subr.bf16.mxu0 0
    %280 = vmatpush1.bf16.msra.mxu0 0
    %281 = vmatprep.subr.bf16.mxu0 0
    %282 = vmatpush1.bf16.msra.mxu0 0
    %283 = vmatprep.subr.bf16.mxu0 0
    %284 = vmatpush1.bf16.msra.mxu0 0
    %285 = vmatprep.subr.bf16.mxu0 0
    %286 = vmatpush1.bf16.msra.mxu0 0
    %287 = vmatprep.subr.bf16.mxu0 0
    %288 = vmatpush1.bf16.msra.mxu0 0
    %289 = vmatprep.subr.bf16.mxu0 0
    %290 = vmatpush1.bf16.msra.mxu0 0
    %291 = vmatprep.subr.bf16.mxu0 0
    %292 = vmatpush1.bf16.msra.mxu0 0
    %293 = vmatprep.mubr.bf16.mxu0 0
    %294 = vmatmul.mubr.bf16.gmra.mrb[0].mxu0 %v189
    %v295 = vpop.f32.mrb[0].mxu0
    %v296 = vadd.f32 %v211, %v295
    %v297 = vpop.f32.mrb[0].mxu0
    %v298 = vpop.f32.mrb[0].mxu0
    %v299 = vadd.f32 %v211, %v298
    %v300 = vpop.f32.mrb[0].mxu0
    %301 = vdwg.mxu0
    %v302 = vadd.f32 %v296, %v72
    %v303 = vadd.f32 %v299, %v73
    %304 = vadd.xlane.f32.xlu0 %v302
    %v305 = vpop.xlane.xlu0 %304
    %306 = vadd.xlane.f32.xlu0 %v303
    %v307 = vpop.xlane.xlu0 %306
    %v308 = vmul.f32 %v305, 0.03125
    %v309 = vmul.f32 %v307, 0.03125
    %v310 = vsub.f32 %v302, %v308
    %v311 = vsub.f32 %v303, %v309
    %v312 = vld [vmem:[%s7] sm:$0x1]
    %v314 = vlaneseq
    %v315 = vshrl.u32 %v314, 7
    %v316 = vsub.s32 0, %v315
    %v317 = vrot.slane %v312, %v316
    %v319 = vmul.f32 %v310, %v317
    %v320 = vmul.f32 %v311, %v317
    %v321 = vmul.f32 %v319, %v319
    %v322 = vmul.f32 %v320, %v320
    %323 = vadd.xlane.f32.xlu0 %v321
    %v324 = vpop.xlane.xlu0 %323
    %325 = vadd.xlane.f32.xlu0 %v322
    %v326 = vpop.xlane.xlu0 %325
    %v327 = vmul.f32 %v324, 0.03125
    %v328 = vmul.f32 %v326, 0.03125
    %v329 = vadd.f32 %v327, 1e-05
    %v330 = vadd.f32 %v328, 1e-05
    %v331 = vrsqrt.pop %v329
    %v332 = vrsqrt.pop %v330
    %v333 = vmul.f32 %v319, %v331
    %v334 = vmul.f32 %v320, %v332
    %v335 = vld [vmem:[%s5] sm:$0x1]
    %v337 = vlaneseq
    %v338 = vshrl.u32 %v337, 7
    %v339 = vsub.s32 0, %v338
    %v340 = vrot.slane %v335, %v339
    %v342 = vmul.f32 %v333, %v340
    %v343 = vmul.f32 %v334, %v340
    %v344 = vld [vmem:[%s6] sm:$0x1]
    %v346 = vlaneseq
    %v347 = vshrl.u32 %v346, 7
    %v348 = vsub.s32 0, %v347
    %v349 = vrot.slane %v344, %v348
    %v351 = vadd.f32 %v342, %v349
    %v352 = vadd.f32 %v343, %v349
    %353 = vst [vmem:[#allocation8] sm:$0xff] %v351
    %354 = vst [vmem:[#allocation8 + $0x8] sm:$0xff] %v352
    // Predicated region
    $region46: #{_mlp_call.1} parent=1 // pred_check
      _
    $region47: #{_mlp_call.1} parent=1 // pred_check_branch
      %356 = sbr.rel (0) target = $region49
    $region48: #{_mlp_call.1} parent=1 // pred_region
      %s358 = ssub.s32 256, 256
      %359 = vsyncadd [#allocation4], %s358
      %s360 = sshll.u32 [#allocation8], 4
      %s361 = int_to_ptr.vmem [resolvable:$true] %s360
      %366 = dma.vmem_to_hbm [thread:$0]  %s361, 256, %s8, [#allocation4], 128, 128, 8
    $region49: #{_mlp_call.1} parent=1 // pred_fallthru
      _
    // Predicated region
    $region50: #{_mlp_call.1} parent=1 // pred_check
      _
    $region51: #{_mlp_call.1} parent=1 // pred_check_branch
      %368 = sbr.rel (0) target = $region53
    $region52: #{_mlp_call.1} parent=1 // pred_region
      %369 = dma.done [#allocation4], 256
    $region53: #{_mlp_call.1} parent=1 // pred_fallthru
      _
    %370 = vsyncpa [#allocation3], 1
    %371 = vsyncpa [#allocation6], 1
    %372 = vsyncpa [#allocation4], 1

</llo_original>
